<compile_context>
chip_gen: v5e
topology: v5e:2x2
jax: 0.10.0
libtpu: 0.0.40
codegen_flags: <defaults>
</compile_context>

<pallas_src>
import math

import jax
import jax.numpy as jnp
from jax.experimental import pallas as pl
from jax.experimental.pallas import tpu as pltpu


def _linear_kernel(x_ref, w_ref, b_ref, o_ref):
    # x_ref: (TB, K)  w_ref: (K, N)  b_ref: (1, N)  o_ref: (TB, N)
    acc = jnp.dot(x_ref[...], w_ref[...], preferred_element_type=jnp.float32)
    o_ref[...] = (acc + b_ref[...].astype(jnp.float32)).astype(o_ref.dtype)


def _round_up(x, m):
    return ((x + m - 1) // m) * m


def _default_block_b():
    """Default row tile, gated on chip generation (best effort)."""
    vmem_cap = 128 << 20
    try:
        info = pltpu.get_tpu_info()
        vmem_cap = int(getattr(info, "vmem_capacity_bytes", vmem_cap))
    except Exception:
        pass
    # v7x exposes <= 64 MiB VMEM per TensorCore and has ~3.2 TB/s HBM, so the
    # per-step DMA is very short: use bigger tiles to amortize the fixed
    # per-grid-step overhead.  8 MiB f32 x tile, 2x-buffered = 16 MiB.
    if vmem_cap <= (96 << 20):
        return 32768
    # v5e / v6e: 4 MiB f32 x tile; total pipeline footprint ~9-10 MiB, which
    # fits even v5e's 16 MiB scoped default (and we raise the limit anyway).
    return 16384


# Above this many rows we force the grid to have >= 2 steps so both v7x
# TensorCores get work (megacore sharding of the "parallel" axis).
_FORCE_MULTI_STEP_B = 4096


def linear(x, w_t, b, *, block_b=None, deep_buffer=True):
    """y = x @ w_t + b, with w_t of shape (in_features, out_features).

    Streams batch tiles through VMEM; the (64,10) weight and (1,10) bias stay
    resident across all grid steps.  Accumulation is always f32.  If the
    caller already holds x in bfloat16, the weight is cast to match (halving
    the dominant HBM read); x itself is never re-cast in the wrapper.
    """
    B, K = x.shape
    K2, N = w_t.shape
    assert K == K2, (K, K2)
    out_dtype = x.dtype

    # Match the tiny weight to the activation dtype (never cast the big x).
    if w_t.dtype != x.dtype:
        w_t = w_t.astype(x.dtype)

    if block_b is None:
        block_b = _default_block_b()
    block_b = max(8, (int(block_b) // 8) * 8)

    # --- batch tile selection -------------------------------------------
    if B > block_b:
        tb = block_b
    elif B >= _FORCE_MULTI_STEP_B:
        # B fits in one tile, but split it so the grid has >= 2 steps and the
        # "parallel" axis can be sharded across two TensorCores (v7x).
        tb = min(block_b, _round_up(pl.cdiv(B, 2), 8))
    else:
        tb = B  # small batch: one (B, K) block (block == full dims is legal)
    num_steps = pl.cdiv(B, tb)
    grid = (num_steps,)

    # Deeper pipelining only pays off for small tiles with several steps.
    use_deep = bool(deep_buffer) and tb <= 2048 and num_steps >= 3
    if use_deep:
        x_spec = pl.BlockSpec((tb, K), lambda i: (i, 0),
                              pipeline_mode=pl.Buffered(3))
        n_x_bufs = 3
    else:
        x_spec = pl.BlockSpec((tb, K), lambda i: (i, 0))
        n_x_bufs = 2

    b2d = b.reshape(1, N)
    in_itemsize = jnp.dtype(x.dtype).itemsize
    out_itemsize = jnp.dtype(out_dtype).itemsize
    b_itemsize = jnp.dtype(b.dtype).itemsize

    # VMEM needed by the pipeline (x bufs + out bufs + resident weight/bias),
    # with 2x headroom, clamped to [8 MiB, 32 MiB].  32 MiB is >= the scoped
    # default on every generation and <= v7x's 64 MiB physical VMEM.
    needed = (n_x_bufs * tb * K * in_itemsize
              + 2 * tb * N * out_itemsize
              + 2 * (K * N * in_itemsize + N * b_itemsize))
    vmem_limit = int(min(32 << 20, max(2 * needed, 8 << 20)))

    cost = pl.CostEstimate(
        flops=2 * B * K * N,
        transcendentals=0,
        bytes_accessed=(B * K * in_itemsize          # x streamed in
                        + K * N * in_itemsize        # weight (once)
                        + N * b_itemsize             # bias (once)
                        + B * N * out_itemsize),     # y streamed out
    )

    return pl.pallas_call(
        _linear_kernel,
        out_shape=jax.ShapeDtypeStruct((B, N), out_dtype),
        grid=grid,
        in_specs=[
            # x: streamed batch tiles (double/triple-buffered DMA).
            x_spec,
            # weight / bias: same block every step -> fetched once, resident.
            pl.BlockSpec((K, N), lambda i: (0, 0)),
            pl.BlockSpec((1, N), lambda i: (0, 0)),
        ],
        out_specs=pl.BlockSpec((tb, N), lambda i: (i, 0)),
        compiler_params=pltpu.CompilerParams(
            dimension_semantics=("parallel",),
            vmem_limit_bytes=vmem_limit,
        ),
        cost_estimate=cost,
    )(x, w_t, b2d)


def init_lin_params(key, in_features=64, out_features=10, dtype=jnp.float32):
    """Deterministic init matching nn.Linear defaults (kaiming-uniform-ish)."""
    kw, kb = jax.random.split(key)
    bound = 1.0 / math.sqrt(in_features)
    w = jax.random.uniform(kw, (out_features, in_features), dtype, -bound, bound)
    b = jax.random.uniform(kb, (out_features,), dtype, -bound, bound)
    return w, b


if __name__ == "__main__":
    key = jax.random.PRNGKey(0)
    k_x, k_p, k_x2, k_x3 = jax.random.split(key, 4)

    in_features, out_features = 64, 10
    w, b = init_lin_params(k_p, in_features, out_features)
    w_t = w.T  # (64, 10): kernel does a plain row-major matmul.

    # 1) Small-shape check (same input layout as the PyTorch module).
    batch = 8
    x = jax.random.normal(k_x, (batch, in_features), dtype=jnp.float32)
    y = linear(x, w_t, b)
    jax.block_until_ready(y)
    y_ref = x @ w.T + b
    assert y.shape == (batch, out_features)
    assert jnp.allclose(y, y_ref, atol=1e-5, rtol=1e-5)

    # 2) Multi-tile path: small block_b forces several grid steps, a ragged
    #    last block, resident-weight reuse and the Buffered(3) x pipeline.
    batch2 = 272
    x2 = jax.random.normal(k_x2, (batch2, in_features), dtype=jnp.float32)
    y2 = linear(x2, w_t, b, block_b=128)
    jax.block_until_ready(y2)
    y2_ref = x2 @ w.T + b
    assert y2.shape == (batch2, out_features)
    assert jnp.allclose(y2, y2_ref, atol=1e-5, rtol=1e-5)

    # 3) Caller-provided bf16 activations: no wrapper cast of x, only the tiny
    #    weight is matched to bf16; f32 accumulation inside the kernel.
    batch3 = 64
    x3 = jax.random.normal(k_x3, (batch3, in_features),
                           dtype=jnp.float32).astype(jnp.bfloat16)
    y3 = linear(x3, w_t, b)
    jax.block_until_ready(y3)
    y3_ref = x3.astype(jnp.float32) @ w.T + b
    assert y3.shape == (batch3, out_features)
    assert jnp.allclose(y3.astype(jnp.float32), y3_ref, atol=0.1, rtol=0.05)

    print("KERNEL_OK")
</pallas_src>

<mosaic_0001>
module attributes {stable_mosaic.version = 11 : i64} {
  func.func @_linear_kernel(%arg0: i32, %arg1: memref<8x64xf32, #tpu.memory_space<vmem>>, %arg2: memref<64x10xf32, #tpu.memory_space<vmem>>, %arg3: memref<1x10xf32, #tpu.memory_space<vmem>>, %arg4: memref<8x10xf32, #tpu.memory_space<vmem>>) attributes {dimension_semantics = [#tpu.dimension_semantics<parallel>], iteration_bounds = array<i64: 1>, scalar_prefetch = 0 : i64, scratch_operands = 0 : i64, tpu.core_type = #tpu.core_type<tc>, window_params = [{transform_indices = @transform_0, window_bounds = array<i64: 8, 64>}, {pipeline_mode = #tpu.pipeline_mode<synchronous>, transform_indices = @transform_1, window_bounds = array<i64: 64, 10>}, {pipeline_mode = #tpu.pipeline_mode<synchronous>, transform_indices = @transform_2, window_bounds = array<i64: 1, 10>}, {transform_indices = @transform_3, window_bounds = array<i64: 8, 10>}]} {
    %c0 = arith.constant 0 : index
    %c0_0 = arith.constant 0 : index
    %0 = vector.load %arg1[%c0, %c0_0] : memref<8x64xf32, #tpu.memory_space<vmem>>, vector<8x64xf32>
    %c0_1 = arith.constant 0 : index
    %c0_2 = arith.constant 0 : index
    %1 = vector.load %arg2[%c0_1, %c0_2] : memref<64x10xf32, #tpu.memory_space<vmem>>, vector<64x10xf32>
    %cst = arith.constant dense<0.000000e+00> : vector<8x10xf32>
    %2 = tpu.matmul %0, %1, %cst {dimension_numbers = #tpu.dot_dimension_numbers<[1], [0], [0], [1], [0, 0, 1, 1], [], []>} : vector<8x64xf32>, vector<64x10xf32>, vector<8x10xf32> -> vector<8x10xf32>
    %c0_3 = arith.constant 0 : index
    %c0_4 = arith.constant 0 : index
    %3 = vector.load %arg3[%c0_3, %c0_4] : memref<1x10xf32, #tpu.memory_space<vmem>>, vector<1x10xf32>
    %4 = vector.broadcast %3 : vector<1x10xf32> to vector<8x10xf32>
    %5 = arith.addf %2, %4 : vector<8x10xf32>
    %c0_5 = arith.constant 0 : index
    %c0_6 = arith.constant 0 : index
    %6 = vector.load %arg4[%c0_5, %c0_6] : memref<8x10xf32, #tpu.memory_space<vmem>>, vector<8x10xf32>
    tpu.vector_store %arg4[%c0_5, %c0_6], %5 {strides = array<i32>} : memref<8x10xf32, #tpu.memory_space<vmem>>, vector<8x10xf32>,
    return
  }
  func.func @transform_0(%arg0: i32) -> (i32, i32) {
    %c0_i32 = arith.constant 0 : i32
    %c0_i32_0 = arith.constant 0 : i32
    return %arg0, %c0_i32 : i32, i32
  }
  func.func @transform_1(%arg0: i32) -> (i32, i32) {
    %c0_i32 = arith.constant 0 : i32
    %c0_i32_0 = arith.constant 0 : i32
    %c0_i32_1 = arith.constant 0 : i32
    return %c0_i32, %c0_i32_0 : i32, i32
  }
  func.func @transform_2(%arg0: i32) -> (i32, i32) {
    %c0_i32 = arith.constant 0 : i32
    %c0_i32_0 = arith.constant 0 : i32
    %c0_i32_1 = arith.constant 0 : i32
    return %c0_i32, %c0_i32_0 : i32, i32
  }
  func.func @transform_3(%arg0: i32) -> (i32, i32) {
    %c0_i32 = arith.constant 0 : i32
    %c0_i32_0 = arith.constant 0 : i32
    return %arg0, %c0_i32 : i32, i32
  }
}

</mosaic_0001>

<llo_original>
// kernel: tpu_custom_call.1
$region0: #{tpu_custom_call.1}
  #allocation0 [shape = 'u32[]', space=smem, size = 0x4, offset = 0x4, fixed_abs, tag = 'smem constant byte address 0x4 - core index']
  #allocation1 [shape = 'u32[72,128]{1,0:T(1,128)}', space=vmem, size = 0x9000, scoped, tag = 'internal scratch']
  %s0 = inlined_call_operand.vmem [shape: f32[8,64], index: 0, kind: input, shape index: {}]
  %s1 = inlined_call_operand.vmem [shape: f32[64,10], index: 1, kind: input, shape index: {}]
  %s2 = inlined_call_operand.vmem [shape: f32[1,10], index: 2, kind: input, shape index: {}]
  %s3 = inlined_call_operand.hbm [shape: f32[8,10], index: 3, kind: output, shape index: {}]
  %s4 = sld [smem:[#allocation0]]
  $region22: #{tpu_custom_call.1} parent=0
    _
  %s6 = ssub.s32 1, %s4
  %s7 = scalar_select 0, %s6, %s4
  $region1: #{tpu_custom_call.1} parent=0
    #allocation2 [shape = 'u8[4096]{0}', space=vmem, size = 0x1000, scoped, tag = 'output window, operand 0, single buffered']
    #allocation3 [shape = 's32[1]{0}', space=sflag, size = 0x4, scoped, tag = 'scoped memory for tpu_custom_call.1']
    %8 = vsyncpa [#allocation3], 0
    // Predicated region
    $region2: #{tpu_custom_call.1} parent=1 // pred_check
      _
    $region3: #{tpu_custom_call.1} parent=1 // pred_check_branch
      %10 = sbr.rel (0) target = $region5
    $region4: #{tpu_custom_call.1} parent=1 // pred_region
      _
    $region5: #{tpu_custom_call.1} parent=1 // pred_fallthru
      _
    // Predicated region
    $region6: #{tpu_custom_call.1} parent=1 // pred_check
      _
    $region7: #{tpu_custom_call.1} parent=1 // pred_check_branch
      %12 = sbr.rel (0) target = $region9
    $region8: #{tpu_custom_call.1} parent=1 // pred_region
      _
    $region9: #{tpu_custom_call.1} parent=1 // pred_fallthru
      _
    // Predicated region
    $region10: #{tpu_custom_call.1} parent=1 // pred_check
      _
    $region11: #{tpu_custom_call.1} parent=1 // pred_check_branch
      %14 = sbr.rel (0) target = $region13
    $region12: #{tpu_custom_call.1} parent=1 // pred_region
      _
    $region13: #{tpu_custom_call.1} parent=1 // pred_fallthru
      _
    %v15 = vld [vmem:[%s0] sm:$0xff]
    %v16 = vld [vmem:[%s1] sm:$0xff]
    %v17 = vld [vmem:[%s1 + $0x8] sm:$0xff]
    %v18 = vld [vmem:[%s1 + $0x10] sm:$0xff]
    %v19 = vld [vmem:[%s1 + $0x18] sm:$0xff]
    %v20 = vld [vmem:[%s1 + $0x20] sm:$0xff]
    %v21 = vld [vmem:[%s1 + $0x28] sm:$0xff]
    %v22 = vld [vmem:[%s1 + $0x30] sm:$0xff]
    %v23 = vld [vmem:[%s1 + $0x38] sm:$0xff]
    %v24 = vld [vmem:[%s2] sm:$0x1]
    %v26 = vperm.slane %v24, 0
    %vm28 = vcmask 523264
    %v30 = vsel %vm28, %v15, 0
    %32 = vmatpush.msra.mxu0 0.0
    %33 = vmatpush.msra.mxu0 0.0
    %34 = vmatpush.msra.mxu0 0.0
    %35 = vmatpush.msra.mxu0 0.0
    %36 = vmatpush.msra.mxu0 0.0
    %37 = vmatpush.msra.mxu0 0.0
    %38 = vmatpush.msra.mxu0 0.0
    %39 = vmatpush.msra.mxu0 0.0
    %40 = vmatpush.msra.mxu0 %v23
    %41 = vmatpush.msra.mxu0 %v22
    %42 = vmatpush.msra.mxu0 %v21
    %43 = vmatpush.msra.mxu0 %v20
    %44 = vmatpush.msra.mxu0 %v19
    %45 = vmatpush.msra.mxu0 %v18
    %46 = vmatpush.msra.mxu0 %v17
    %47 = vmatpush.msra.mxu0 %v16
    %48 = vmatmul.f32.gmra.mxu0 %v30
    %v49 = vpop.f32.mrf.mxu0
    %v50 = vadd.f32 %v26, %v49
    %51 = vdwg.mxu0
    %vm52 = vcmask 80896
    %53 = vst.msk [vmem:[#allocation2] sm:$0xff] %vm52, %v50
    // Predicated region
    $region14: #{tpu_custom_call.1} parent=1 // pred_check
      _
    $region15: #{tpu_custom_call.1} parent=1 // pred_check_branch
      %55 = sbr.rel (0) target = $region17
    $region16: #{tpu_custom_call.1} parent=1 // pred_region
      %57 = vsyncadd [#allocation3], 0
      %s59 = sshll.u32 [#allocation2], 4
      %s60 = int_to_ptr.vmem [resolvable:$true] %s59
      %s61 = sshll.u32 %s3, 4
      %s62 = int_to_ptr.hbm [resolvable:$true] %s61
      %64 = dma.vmem_to_hbm [thread:$0]  %s60, 128, %s62, [#allocation3]
    $region17: #{tpu_custom_call.1} parent=1 // pred_fallthru
      _
    // Predicated region
    $region18: #{tpu_custom_call.1} parent=1 // pred_check
      _
    $region19: #{tpu_custom_call.1} parent=1 // pred_check_branch
      %66 = sbr.rel (0) target = $region21
    $region20: #{tpu_custom_call.1} parent=1 // pred_region
      %68 = dma.done [#allocation3], 128
    $region21: #{tpu_custom_call.1} parent=1 // pred_fallthru
      _
    %69 = vsyncpa [#allocation3], 1

</llo_original>
